<compile_context>
chip_gen: v7x
topology: tpu7x:2x2x1
jax: 0.10.0
libtpu: 0.0.40
codegen_flags: <defaults>
</compile_context>

<pallas_src>
import math

import jax
import jax.numpy as jnp
from jax import lax
from jax.experimental import pallas as pl
from jax.experimental.pallas import tpu as pltpu


def _round_up(x: int, k: int) -> int:
    return ((x + k - 1) // k) * k


def _simple_nonlinear_kernel(x_ref, w_ref, b_ref, out_ref):
    x = x_ref[...]            # (TS, N_pad)    compute dtype (bf16 by default)
    w = w_ref[...]            # (N_pad, M_pad) compute dtype, VMEM-resident
    b = b_ref[...]            # (1, N_pad)     f32, VMEM-resident

    # hidden = x @ W  (MXU, f32 accumulate)
    hidden = jnp.dot(x, w, preferred_element_type=jnp.float32)      # (TS, M_pad)

    # recon = hidden @ W.T, expressed as a contraction over d_hidden (axis 1 of
    # both operands) -> native transposed-RHS MXU matmul, no W.T materialized.
    recon = lax.dot_general(
        hidden.astype(w.dtype), w,
        dimension_numbers=(((1,), (1,)), ((), ())),
        preferred_element_type=jnp.float32,
    )                                                                # (TS, N_pad)

    # Bias add + ReLU in f32.
    out_ref[...] = jnp.maximum(recon + b, 0.0).astype(out_ref.dtype)


def simple_nonlinear(
    x, W, b, *,
    tile_s: int = 512,
    compute_dtype=jnp.bfloat16,
    vmem_budget_bytes: int = 44 * 1024 * 1024,   # conservative: fits v7x 64 MiB/TC
    single_buffer_weights: bool = True,
    allow_xla_fallback: bool = True,
):
    """x: (S, n), W: (n, m), b: (n,) -> relu((x @ W) @ W.T + b), shape (S, n)."""
    S, N = x.shape
    Nw, M = W.shape
    assert Nw == N and b.shape == (N,)
    out_dtype = x.dtype

    # ---- Tiny-problem bypass: padding overhead would dominate; plain XLA wins.
    if allow_xla_fallback:
        n_pad_t, m_pad_t, s_pad_t = _round_up(N, 128), _round_up(M, 128), _round_up(S, 16)
        inflation = (s_pad_t * n_pad_t * m_pad_t) / max(1, S * N * M)
        if inflation > 8.0 or (S * N * M) < (1 << 18):
            hidden = jnp.dot(x, W)
            return jnp.maximum(jnp.dot(hidden, W.T) + b[None, :], 0.0).astype(out_dtype)

    # ---- Lane-dense padded dims (last dim multiple of 128).
    N_pad = _round_up(N, 128)
    M_pad = _round_up(M, 128)
    bpe_c = jnp.dtype(compute_dtype).itemsize
    bpe_o = jnp.dtype(out_dtype).itemsize
    w_buffers = 1 if single_buffer_weights else 2

    # ---- Derive the sample tile TS from the VMEM budget.
    # Resident:   w_buffers * W + b (+ ~1 MiB internal scratch headroom)
    # Per step:   double-buffered x tile + double-buffered out tile.
    fixed_bytes = w_buffers * N_pad * M_pad * bpe_c + 2 * N_pad * 4 + (1 << 20)
    per_row_bytes = 2 * N_pad * (bpe_c + bpe_o)
    avail = vmem_budget_bytes - fixed_bytes
    if avail < 16 * per_row_bytes:
        # At this scale, hold-W-resident is no longer viable; would need a
        # K-tiled variant (reduction grid axis over d_hidden + f32 accumulator).
        raise ValueError("W too large for resident-W kernel; use a K-tiled variant.")

    TS = (avail // per_row_bytes) // 16 * 16          # multiple of 16 (bf16 sublane pack)
    TS = max(16, min(TS, _round_up(tile_s, 16), _round_up(S, 16)))

    # If one tile covers all samples but the workload is big enough, split into
    # >=2 tiles so the "parallel" axis shards across v7x's two TensorCores
    # (per-step overhead elsewhere is only ~0.35 us).
    if _round_up(S, TS) // TS == 1:
        half = _round_up(math.ceil(S / 2), 16)
        if 128 <= half < TS:
            TS = half

    S_pad = _round_up(S, TS)
    grid = (S_pad // TS,)

    # ---- Pad / cast inputs only when needed (zero padding is semantics-
    # preserving: padded rows/cols contribute 0 and padded outputs are sliced).
    if (S_pad, N_pad) == (S, N):
        x_p = x.astype(compute_dtype)
    else:
        x_p = jnp.zeros((S_pad, N_pad), compute_dtype).at[:S, :N].set(x.astype(compute_dtype))
    if (N_pad, M_pad) == (N, M):
        W_p = W.astype(compute_dtype)
    else:
        W_p = jnp.zeros((N_pad, M_pad), compute_dtype).at[:N, :M].set(W.astype(compute_dtype))
    if N_pad == N:
        b_p = b.astype(jnp.float32).reshape(1, N)
    else:
        b_p = jnp.zeros((1, N_pad), jnp.float32).at[0, :N].set(b.astype(jnp.float32))

    # ---- Explicit VMEM limit from the actual footprint (+25% / +2 MiB headroom).
    vmem_usage = (2 * TS * N_pad * bpe_c          # x tile, double-buffered
                  + 2 * TS * N_pad * bpe_o        # out tile, double-buffered
                  + w_buffers * N_pad * M_pad * bpe_c
                  + w_buffers * N_pad * 4)
    vmem_limit = min(max(int(vmem_usage * 1.25) + (2 << 20), 8 << 20), 128 << 20)

    cost = pl.CostEstimate(
        flops=4 * S_pad * N_pad * M_pad,          # two matmuls
        transcendentals=0,
        bytes_accessed=(S_pad * N_pad * (bpe_c + bpe_o)
                        + N_pad * M_pad * bpe_c + N_pad * 4),
    )

    if single_buffer_weights:
        w_spec = pl.BlockSpec((N_pad, M_pad), lambda i: (0, 0), pipeline_mode=pl.Buffered(1))
        b_spec = pl.BlockSpec((1, N_pad), lambda i: (0, 0), pipeline_mode=pl.Buffered(1))
    else:
        w_spec = pl.BlockSpec((N_pad, M_pad), lambda i: (0, 0))
        b_spec = pl.BlockSpec((1, N_pad), lambda i: (0, 0))

    out_p = pl.pallas_call(
        _simple_nonlinear_kernel,
        out_shape=jax.ShapeDtypeStruct((S_pad, N_pad), out_dtype),
        grid=grid,
        in_specs=[
            pl.BlockSpec((TS, N_pad), lambda i: (i, 0)),   # x: streamed per step
            w_spec,                                        # W: VMEM-resident
            b_spec,                                        # b: VMEM-resident
        ],
        out_specs=pl.BlockSpec((TS, N_pad), lambda i: (i, 0)),
        compiler_params=pltpu.CompilerParams(
            dimension_semantics=("parallel",),
            vmem_limit_bytes=vmem_limit,
            allow_input_fusion=[True, True, True],
        ),
        cost_estimate=cost,
    )(x_p, W_p, b_p)

    if (S_pad, N_pad) == (S, N):
        return out_p
    return out_p[:S, :N]


if __name__ == "__main__":
    n_feat, d_hidden = 20, 5        # matches module globals n, m
    num_samples = 8

    key = jax.random.PRNGKey(0)
    kx, kw, kb = jax.random.split(key, 3)

    # torch.rand -> uniform [0, 1)
    W = jax.random.uniform(kw, (n_feat, d_hidden), dtype=jnp.float32)
    b = jax.random.uniform(kb, (n_feat,), dtype=jnp.float32)
    x = jax.random.uniform(kx, (num_samples, n_feat), dtype=jnp.float32)

    ref = jnp.maximum((x @ W) @ W.T + b[None, :], 0.0)

    fn = jax.jit(simple_nonlinear,
                 static_argnames=("compute_dtype", "allow_xla_fallback"))

    # f32 compute path: tight correctness check of the kernel structure.
    out_f32 = jax.block_until_ready(
        fn(x, W, b, compute_dtype=jnp.float32, allow_xla_fallback=False))
    assert out_f32.shape == (num_samples, n_feat)
    assert jnp.allclose(out_f32, ref, atol=1e-5, rtol=1e-5)

    # bf16 MXU path (default perf path): looser tolerance (bf16 inputs, f32 acc).
    out_bf16 = jax.block_until_ready(fn(x, W, b, allow_xla_fallback=False))
    assert out_bf16.shape == (num_samples, n_feat)
    assert jnp.allclose(out_bf16, ref, atol=1e-1, rtol=3e-2)

    print("KERNEL_OK")
</pallas_src>

<mosaic_0001>
module attributes {stable_mosaic.version = 11 : i64} {
  func.func @_simple_nonlinear_kernel(%arg0: i32, %arg1: memref<16x128xf32, #tpu.memory_space<vmem>>, %arg2: memref<128x128xf32, #tpu.memory_space<vmem>>, %arg3: memref<1x128xf32, #tpu.memory_space<vmem>>, %arg4: memref<16x128xf32, #tpu.memory_space<vmem>>) attributes {dimension_semantics = [#tpu.dimension_semantics<parallel>], iteration_bounds = array<i64: 1>, scalar_prefetch = 0 : i64, scratch_operands = 0 : i64, tpu.core_type = #tpu.core_type<tc>, window_params = [{transform_indices = @transform_0, window_bounds = array<i64: 16, 128>}, {pipeline_mode = #tpu.pipeline_mode<synchronous>, transform_indices = @transform_1, window_bounds = array<i64: 128, 128>}, {pipeline_mode = #tpu.pipeline_mode<synchronous>, transform_indices = @transform_2, window_bounds = array<i64: 1, 128>}, {transform_indices = @transform_3, window_bounds = array<i64: 16, 128>}]} {
    %c0 = arith.constant 0 : index
    %c0_0 = arith.constant 0 : index
    %0 = vector.load %arg1[%c0, %c0_0] : memref<16x128xf32, #tpu.memory_space<vmem>>, vector<16x128xf32>
    %c0_1 = arith.constant 0 : index
    %c0_2 = arith.constant 0 : index
    %1 = vector.load %arg2[%c0_1, %c0_2] : memref<128x128xf32, #tpu.memory_space<vmem>>, vector<128x128xf32>
    %c0_3 = arith.constant 0 : index
    %c0_4 = arith.constant 0 : index
    %2 = vector.load %arg3[%c0_3, %c0_4] : memref<1x128xf32, #tpu.memory_space<vmem>>, vector<1x128xf32>
    %cst = arith.constant dense<0.000000e+00> : vector<16x128xf32>
    %3 = tpu.matmul %0, %1, %cst {dimension_numbers = #tpu.dot_dimension_numbers<[1], [0], [0], [1], [0, 0, 1, 1], [], []>} : vector<16x128xf32>, vector<128x128xf32>, vector<16x128xf32> -> vector<16x128xf32>
    %cst_5 = arith.constant dense<0.000000e+00> : vector<16x128xf32>
    %4 = tpu.matmul %3, %1, %cst_5 {dimension_numbers = #tpu.dot_dimension_numbers<[1], [1], [0], [0], [0, 0, 1, 0], [], []>} : vector<16x128xf32>, vector<128x128xf32>, vector<16x128xf32> -> vector<16x128xf32>
    %5 = vector.broadcast %2 : vector<1x128xf32> to vector<16x128xf32>
    %6 = arith.addf %4, %5 : vector<16x128xf32>
    %cst_6 = arith.constant 0.000000e+00 : f32
    %7 = vector.broadcast %cst_6 : f32 to vector<16x128xf32>
    %8 = arith.maximumf %6, %7 : vector<16x128xf32>
    %c0_7 = arith.constant 0 : index
    %c0_8 = arith.constant 0 : index
    %9 = vector.load %arg4[%c0_7, %c0_8] : memref<16x128xf32, #tpu.memory_space<vmem>>, vector<16x128xf32>
    tpu.vector_store %arg4[%c0_7, %c0_8], %8 {strides = array<i32>} : memref<16x128xf32, #tpu.memory_space<vmem>>, vector<16x128xf32>,
    return
  }
  func.func @transform_0(%arg0: i32) -> (i32, i32) {
    %c0_i32 = arith.constant 0 : i32
    %c0_i32_0 = arith.constant 0 : i32
    return %arg0, %c0_i32 : i32, i32
  }
  func.func @transform_1(%arg0: i32) -> (i32, i32) {
    %c0_i32 = arith.constant 0 : i32
    %c0_i32_0 = arith.constant 0 : i32
    %c0_i32_1 = arith.constant 0 : i32
    return %c0_i32, %c0_i32_0 : i32, i32
  }
  func.func @transform_2(%arg0: i32) -> (i32, i32) {
    %c0_i32 = arith.constant 0 : i32
    %c0_i32_0 = arith.constant 0 : i32
    %c0_i32_1 = arith.constant 0 : i32
    return %c0_i32, %c0_i32_0 : i32, i32
  }
  func.func @transform_3(%arg0: i32) -> (i32, i32) {
    %c0_i32 = arith.constant 0 : i32
    %c0_i32_0 = arith.constant 0 : i32
    return %arg0, %c0_i32 : i32, i32
  }
}

</mosaic_0001>

<llo_original>
// kernel: simple_nonlinear.2
$region0: #{simple_nonlinear.2}
  #allocation0 [shape = 'u32[]', space=smem, size = 0x4, offset = 0x4, fixed_abs, tag = 'smem constant byte address 0x4 - core index']
  #allocation1 [shape = 'u32[144,128]{1,0:T(1,128)}', space=vmem, size = 0x12000, scoped, tag = 'internal scratch']
  #allocation2 [shape = 'u32[2048]{0}', space=vmem, size = 0x2000, scoped, tag = 'scoped memory for simple_nonlinear.2']
  #allocation3 [shape = 'u32[2048]{0}', space=vmem, size = 0x2000, scoped, tag = 'scoped memory for simple_nonlinear.2']
  #allocation4 [shape = 'u32[2048]{0}', space=vmem, size = 0x2000, scoped, tag = 'scoped memory for simple_nonlinear.2']
  #allocation5 [shape = 'u32[2048]{0}', space=vmem, size = 0x2000, scoped, tag = 'scoped memory for simple_nonlinear.2']
  #allocation6 [shape = 'u32[2048]{0}', space=vmem, size = 0x2000, scoped, tag = 'scoped memory for simple_nonlinear.2']
  #allocation7 [shape = 'u32[2048]{0}', space=vmem, size = 0x2000, scoped, tag = 'scoped memory for simple_nonlinear.2']
  #allocation8 [shape = 'u32[2048]{0}', space=vmem, size = 0x2000, scoped, tag = 'scoped memory for simple_nonlinear.2']
  #allocation9 [shape = 'u32[2048]{0}', space=vmem, size = 0x2000, scoped, tag = 'scoped memory for simple_nonlinear.2']
  #allocation10 [shape = 'u32[2048]{0}', space=vmem, size = 0x2000, scoped, tag = 'scoped memory for simple_nonlinear.2']
  #allocation11 [shape = 'u32[2048]{0}', space=vmem, size = 0x2000, scoped, tag = 'scoped memory for simple_nonlinear.2']
  #allocation12 [shape = 'u32[2048]{0}', space=vmem, size = 0x2000, scoped, tag = 'scoped memory for simple_nonlinear.2']
  #allocation13 [shape = 'u32[2048]{0}', space=vmem, size = 0x2000, scoped, tag = 'scoped memory for simple_nonlinear.2']
  #allocation14 [shape = 'u32[2048]{0}', space=vmem, size = 0x2000, scoped, tag = 'scoped memory for simple_nonlinear.2']
  #allocation15 [shape = 'u32[2048]{0}', space=vmem, size = 0x2000, scoped, tag = 'scoped memory for simple_nonlinear.2']
  #allocation16 [shape = 'u32[2048]{0}', space=vmem, size = 0x2000, scoped, tag = 'scoped memory for simple_nonlinear.2']
  %s0 = inlined_call_operand.vmem [shape: f32[20,5], index: 0, kind: input, shape index: {}]
  %s1 = inlined_call_operand.<no memory space> [shape: f32[], index: 1, kind: input, shape index: {}]
  %s2 = inlined_call_operand.vmem [shape: f32[8,20], index: 2, kind: input, shape index: {}]
  %s3 = inlined_call_operand.vmem [shape: f32[1,20], index: 3, kind: input, shape index: {}]
  %s4 = inlined_call_operand.vmem [shape: f32[16,128], index: 4, kind: output, shape index: {}]
  %s5 = sld [smem:[#allocation0]]
  $region22: #{simple_nonlinear.2} parent=0
    _
  %s7 = ssub.s32 1, %s5
  %s8 = scalar_select 0, %s7, %s5
  %v9 = vstv %s1
  %v10 = vstv %s1
  %v11 = vstv %s1
  $region1: #{simple_nonlinear.2} parent=0
    #allocation17 [shape = 'u8[8192]{0}', space=vmem, size = 0x2000, dematerialized = true, scoped, tag = 'FusionAdapter Buffer %fusion.2 = f32[16,128]{1,0:T(8,128)} fusion(%param_2.9, %param_1.12), kind=kLoop, calls=%fused_computation.2.clone, metadata={op_name="jit(simple_nonlinear)/scatter" stack_frame_id=9}']
    #allocation18 [shape = 'u8[65536]{0}', space=vmem, size = 0x10000, dematerialized = true, scoped, tag = 'FusionAdapter Buffer %fusion.1 = f32[128,128]{1,0:T(8,128)} fusion(%param_0.12, %param_1.12), kind=kLoop, calls=%fused_computation.1.clone, metadata={op_name="jit(simple_nonlinear)/scatter" stack_frame_id=8}']
    #allocation19 [shape = 'u8[512]{0}', space=vmem, size = 0x400, dematerialized = true, scoped, tag = 'FusionAdapter Buffer %fusion.4 = f32[1,128]{1,0:T(1,128)} fusion(%param_3.2, %param_1.12), kind=kLoop, calls=%fused_computation.6.clone, metadata={op_name="jit(simple_nonlinear)/scatter" stack_frame_id=7}']
    // Predicated region
    $region2: #{simple_nonlinear.2} parent=1 // pred_check
      _
    $region3: #{simple_nonlinear.2} parent=1 // pred_check_branch
      %13 = sbr.rel (0) target = $region5
    $region4: #{simple_nonlinear.2} parent=1 // pred_region
      _
    $region5: #{simple_nonlinear.2} parent=1 // pred_fallthru
      _
    // Predicated region
    $region6: #{simple_nonlinear.2} parent=1 // pred_check
      _
    $region7: #{simple_nonlinear.2} parent=1 // pred_check_branch
      %15 = sbr.rel (0) target = $region9
    $region8: #{simple_nonlinear.2} parent=1 // pred_region
      _
    $region9: #{simple_nonlinear.2} parent=1 // pred_fallthru
      _
    // Predicated region
    $region10: #{simple_nonlinear.2} parent=1 // pred_check
      _
    $region11: #{simple_nonlinear.2} parent=1 // pred_check_branch
      %17 = sbr.rel (0) target = $region13
    $region12: #{simple_nonlinear.2} parent=1 // pred_region
      _
    $region13: #{simple_nonlinear.2} parent=1 // pred_fallthru
      _
    %v18 = vld [vmem:[%s2] sm:$0xff]
    %v19 = vlaneseq
    %v20 = vand.u32 %v19, 127
    %vm22 = vcmp.lt.s32.totalorder %v20, 20
    %v23 = vsel %vm22, %v18, %v9
    %25 = vst [vmem:[#allocation17] sm:$0xff] %v23
    %s26 = scalar_lea.vmem [#allocation17], 8
    %28 = vst [vmem:[%s26] sm:$0xff] %v9
    %v29 = vld [vmem:[%s0] sm:$0xff]
    %v30 = vlaneseq
    %v31 = vshrl.u32 %v30, 7
    %vm33 = vcmp.lt.s32.totalorder %v31, 20
    %v34 = vsel %vm33, %v29, %v10
    %v35 = vlaneseq
    %v36 = vand.u32 %v35, 127
    %vm38 = vcmp.lt.s32.totalorder %v36, 5
    %v39 = vsel %vm38, %v34, %v10
    %41 = vst [vmem:[#allocation18] sm:$0xff] %v39
    %s42 = scalar_lea.vmem %s0, 8
    %v43 = vld [vmem:[%s42] sm:$0xff]
    %v44 = vlaneseq
    %v45 = vshrl.u32 %v44, 7
    %v46 = vadd.s32 %v45, 8
    %vm47 = vcmp.lt.s32.totalorder %v46, 20
    %v48 = vsel %vm47, %v43, %v10
    %v49 = vlaneseq
    %v50 = vand.u32 %v49, 127
    %vm52 = vcmp.lt.s32.totalorder %v50, 5
    %v53 = vsel %vm52, %v48, %v10
    %s54 = scalar_lea.vmem [#allocation18], 8
    %56 = vst [vmem:[%s54] sm:$0xff] %v53
    %s57 = scalar_lea.vmem %s0, 16
    %v58 = vld [vmem:[%s57] sm:$0xff]
    %v59 = vlaneseq
    %v60 = vshrl.u32 %v59, 7
    %v61 = vadd.s32 %v60, 16
    %vm62 = vcmp.lt.s32.totalorder %v61, 20
    %v63 = vsel %vm62, %v58, %v10
    %v64 = vlaneseq
    %v65 = vand.u32 %v64, 127
    %vm67 = vcmp.lt.s32.totalorder %v65, 5
    %v68 = vsel %vm67, %v63, %v10
    %s69 = scalar_lea.vmem [#allocation18], 16
    %71 = vst [vmem:[%s69] sm:$0xff] %v68
    %s72 = scalar_lea.vmem [#allocation18], 24
    %74 = vst [vmem:[%s72] sm:$0xff] %v10
    %s75 = scalar_lea.vmem [#allocation18], 32
    %77 = vst [vmem:[%s75] sm:$0xff] %v10
    %s78 = scalar_lea.vmem [#allocation18], 40
    %80 = vst [vmem:[%s78] sm:$0xff] %v10
    %s81 = scalar_lea.vmem [#allocation18], 48
    %83 = vst [vmem:[%s81] sm:$0xff] %v10
    %s84 = scalar_lea.vmem [#allocation18], 56
    %86 = vst [vmem:[%s84] sm:$0xff] %v10
    %s87 = scalar_lea.vmem [#allocation18], 64
    %89 = vst [vmem:[%s87] sm:$0xff] %v10
    %s90 = scalar_lea.vmem [#allocation18], 72
    %92 = vst [vmem:[%s90] sm:$0xff] %v10
    %s93 = scalar_lea.vmem [#allocation18], 80
    %95 = vst [vmem:[%s93] sm:$0xff] %v10
    %s96 = scalar_lea.vmem [#allocation18], 88
    %98 = vst [vmem:[%s96] sm:$0xff] %v10
    %s99 = scalar_lea.vmem [#allocation18], 96
    %101 = vst [vmem:[%s99] sm:$0xff] %v10
    %s102 = scalar_lea.vmem [#allocation18], 104
    %104 = vst [vmem:[%s102] sm:$0xff] %v10
    %s105 = scalar_lea.vmem [#allocation18], 112
    %107 = vst [vmem:[%s105] sm:$0xff] %v10
    %s108 = scalar_lea.vmem [#allocation18], 120
    %110 = vst [vmem:[%s108] sm:$0xff] %v10
    %v111 = vld [vmem:[%s3] sm:$0x1]
    %v112 = vlaneseq
    %v113 = vshrl.u32 %v112, 7
    %vm115 = vcmp.lt.s32.totalorder %v113, 1
    %v116 = vsel %vm115, %v111, %v11
    %v117 = vlaneseq
    %v118 = vand.u32 %v117, 127
    %vm120 = vcmp.lt.s32.totalorder %v118, 20
    %v121 = vsel %vm120, %v116, %v11
    %123 = vst [vmem:[#allocation19] sm:$0x1] %v121
    %v124 = vld [vmem:[#allocation17] sm:$0xff]
    %v125 = vld [vmem:[#allocation17 + $0x8] sm:$0xff]
    %v126 = vld [vmem:[#allocation18] sm:$0xff]
    %v127 = vld [vmem:[#allocation18 + $0x8] sm:$0xff]
    %v128 = vld [vmem:[#allocation18 + $0x10] sm:$0xff]
    %v129 = vld [vmem:[#allocation18 + $0x18] sm:$0xff]
    %v130 = vld [vmem:[#allocation18 + $0x20] sm:$0xff]
    %v131 = vld [vmem:[#allocation18 + $0x28] sm:$0xff]
    %v132 = vld [vmem:[#allocation18 + $0x30] sm:$0xff]
    %v133 = vld [vmem:[#allocation18 + $0x38] sm:$0xff]
    %v134 = vld [vmem:[#allocation18 + $0x40] sm:$0xff]
    %v135 = vld [vmem:[#allocation18 + $0x48] sm:$0xff]
    %v136 = vld [vmem:[#allocation18 + $0x50] sm:$0xff]
    %v137 = vld [vmem:[#allocation18 + $0x58] sm:$0xff]
    %v138 = vld [vmem:[#allocation18 + $0x60] sm:$0xff]
    %v139 = vld [vmem:[#allocation18 + $0x68] sm:$0xff]
    %v140 = vld [vmem:[#allocation18 + $0x70] sm:$0xff]
    %v141 = vld [vmem:[#allocation18 + $0x78] sm:$0xff]
    %v142 = vld [vmem:[#allocation19] sm:$0x1]
    %143 = vmatprep.subr.mxu0 0.0
    %144 = vmatpush1.msra.mxu0 %v126
    %145 = vmatprep.subr.mxu0 0.0
    %146 = vmatpush1.msra.mxu0 %v127
    %147 = vmatprep.subr.mxu0 0.0
    %148 = vmatpush1.msra.mxu0 %v128
    %149 = vmatprep.subr.mxu0 0.0
    %150 = vmatpush1.msra.mxu0 %v129
    %151 = vmatprep.subr.mxu0 0.0
    %152 = vmatpush1.msra.mxu0 %v130
    %153 = vmatprep.subr.mxu0 0.0
    %154 = vmatpush1.msra.mxu0 %v131
    %155 = vmatprep.subr.mxu0 0.0
    %156 = vmatpush1.msra.mxu0 %v132
    %157 = vmatprep.subr.mxu0 0.0
    %158 = vmatpush1.msra.mxu0 %v133
    %159 = vmatprep.subr.mxu0 0.0
    %160 = vmatpush1.msra.mxu0 %v134
    %161 = vmatprep.subr.mxu0 0.0
    %162 = vmatpush1.msra.mxu0 %v135
    %163 = vmatprep.subr.mxu0 0.0
    %164 = vmatpush1.msra.mxu0 %v136
    %165 = vmatprep.subr.mxu0 0.0
    %166 = vmatpush1.msra.mxu0 %v137
    %167 = vmatprep.subr.mxu0 0.0
    %168 = vmatpush1.msra.mxu0 %v138
    %169 = vmatprep.subr.mxu0 0.0
    %170 = vmatpush1.msra.mxu0 %v139
    %171 = vmatprep.subr.mxu0 0.0
    %172 = vmatpush1.msra.mxu0 %v140
    %173 = vmatprep.subr.mxu0 0.0
    %174 = vmatpush1.msra.mxu0 %v141
    %175 = vmatprep.subr.mxu0 0.0
    %176 = vmatpush1.msra.mxu0 0.0
    %177 = vmatprep.subr.mxu0 0.0
    %178 = vmatpush1.msra.mxu0 0.0
    %179 = vmatprep.subr.mxu0 0.0
    %180 = vmatpush1.msra.mxu0 0.0
    %181 = vmatprep.subr.mxu0 0.0
    %182 = vmatpush1.msra.mxu0 0.0
    %183 = vmatprep.subr.mxu0 0.0
    %184 = vmatpush1.msra.mxu0 0.0
    %185 = vmatprep.subr.mxu0 0.0
    %186 = vmatpush1.msra.mxu0 0.0
    %187 = vmatprep.subr.mxu0 0.0
    %188 = vmatpush1.msra.mxu0 0.0
    %189 = vmatprep.subr.mxu0 0.0
    %190 = vmatpush1.msra.mxu0 0.0
    %191 = vmatprep.subr.mxu0 0.0
    %192 = vmatpush1.msra.mxu0 0.0
    %193 = vmatprep.subr.mxu0 0.0
    %194 = vmatpush1.msra.mxu0 0.0
    %195 = vmatprep.subr.mxu0 0.0
    %196 = vmatpush1.msra.mxu0 0.0
    %197 = vmatprep.subr.mxu0 0.0
    %198 = vmatpush1.msra.mxu0 0.0
    %199 = vmatprep.subr.mxu0 0.0
    %200 = vmatpush1.msra.mxu0 0.0
    %201 = vmatprep.subr.mxu0 0.0
    %202 = vmatpush1.msra.mxu0 0.0
    %203 = vmatprep.subr.mxu0 0.0
    %204 = vmatpush1.msra.mxu0 0.0
    %205 = vmatprep.subr.mxu0 0.0
    %206 = vmatpush1.msra.mxu0 0.0
    %207 = vmatprep.mubr.f32.mxu0 0.0
    %208 = vmatmul.mubr.f32.gmra.mrb[0].mxu0 %v124
    %v209 = vpop.f32.mrb[0].mxu0
    %v210 = vadd.f32 0.0, %v209
    %v211 = vpop.f32.mrb[0].mxu0
    %212 = vmatprep.mubr.f32.mxu0 0.0
    %213 = vmatmul.mubr.f32.gmra.mrb[0].mxu0 %v125
    %v214 = vpop.f32.mrb[0].mxu0
    %v215 = vadd.f32 0.0, %v214
    %v216 = vpop.f32.mrb[0].mxu0
    %217 = vdwg.mxu0
    %v219 = vlaneseq
    %v220 = vshrl.u32 %v219, 7
    %v221 = vsub.s32 0, %v220
    %v222 = vrot.slane %v142, %v221
    %224 = vmatprep.subr.mxu0 0.0
    %225 = vmatpush1.xpose.msra.mxu0 %v126
    %226 = vmatprep.subr.mxu0 0.0
    %227 = vmatpush1.xpose.msra.mxu0 %v127
    %228 = vmatprep.subr.mxu0 0.0
    %229 = vmatpush1.xpose.msra.mxu0 %v128
    %230 = vmatprep.subr.mxu0 0.0
    %231 = vmatpush1.xpose.msra.mxu0 %v129
    %232 = vmatprep.subr.mxu0 0.0
    %233 = vmatpush1.xpose.msra.mxu0 %v130
    %234 = vmatprep.subr.mxu0 0.0
    %235 = vmatpush1.xpose.msra.mxu0 %v131
    %236 = vmatprep.subr.mxu0 0.0
    %237 = vmatpush1.xpose.msra.mxu0 %v132
    %238 = vmatprep.subr.mxu0 0.0
    %239 = vmatpush1.xpose.msra.mxu0 %v133
    %240 = vmatprep.subr.mxu0 0.0
    %241 = vmatpush1.xpose.msra.mxu0 %v134
    %242 = vmatprep.subr.mxu0 0.0
    %243 = vmatpush1.xpose.msra.mxu0 %v135
    %244 = vmatprep.subr.mxu0 0.0
    %245 = vmatpush1.xpose.msra.mxu0 %v136
    %246 = vmatprep.subr.mxu0 0.0
    %247 = vmatpush1.xpose.msra.mxu0 %v137
    %248 = vmatprep.subr.mxu0 0.0
    %249 = vmatpush1.xpose.msra.mxu0 %v138
    %250 = vmatprep.subr.mxu0 0.0
    %251 = vmatpush1.xpose.msra.mxu0 %v139
    %252 = vmatprep.subr.mxu0 0.0
    %253 = vmatpush1.xpose.msra.mxu0 %v140
    %254 = vmatprep.subr.mxu0 0.0
    %255 = vmatpush1.xpose.msra.mxu0 %v141
    %256 = vmatprep.subr.mxu0 0.0
    %257 = vmatpush1.xpose.msra.mxu0 0.0
    %258 = vmatprep.subr.mxu0 0.0
    %259 = vmatpush1.xpose.msra.mxu0 0.0
    %260 = vmatprep.subr.mxu0 0.0
    %261 = vmatpush1.xpose.msra.mxu0 0.0
    %262 = vmatprep.subr.mxu0 0.0
    %263 = vmatpush1.xpose.msra.mxu0 0.0
    %264 = vmatprep.subr.mxu0 0.0
    %265 = vmatpush1.xpose.msra.mxu0 0.0
    %266 = vmatprep.subr.mxu0 0.0
    %267 = vmatpush1.xpose.msra.mxu0 0.0
    %268 = vmatprep.subr.mxu0 0.0
    %269 = vmatpush1.xpose.msra.mxu0 0.0
    %270 = vmatprep.subr.mxu0 0.0
    %271 = vmatpush1.xpose.msra.mxu0 0.0
    %272 = vmatprep.subr.mxu0 0.0
    %273 = vmatpush1.xpose.msra.mxu0 0.0
    %274 = vmatprep.subr.mxu0 0.0
    %275 = vmatpush1.xpose.msra.mxu0 0.0
    %276 = vmatprep.subr.mxu0 0.0
    %277 = vmatpush1.xpose.msra.mxu0 0.0
    %278 = vmatprep.subr.mxu0 0.0
    %279 = vmatpush1.xpose.msra.mxu0 0.0
    %280 = vmatprep.subr.mxu0 0.0
    %281 = vmatpush1.xpose.msra.mxu0 0.0
    %282 = vmatprep.subr.mxu0 0.0
    %283 = vmatpush1.xpose.msra.mxu0 0.0
    %284 = vmatprep.subr.mxu0 0.0
    %285 = vmatpush1.xpose.msra.mxu0 0.0
    %286 = vmatprep.subr.mxu0 0.0
    %287 = vmatpush1.xpose.msra.mxu0 0.0
    %288 = vmatprep.mubr.f32.mxu0 0.0
    %289 = vmatmul.mubr.f32.gmra.mrb[0].mxu0 %v210
    %v290 = vpop.f32.mrb[0].mxu0
    %v291 = vadd.f32 %v222, %v290
    %v292 = vpop.f32.mrb[0].mxu0
    %293 = vmatprep.mubr.f32.mxu0 0.0
    %294 = vmatmul.mubr.f32.gmra.mrb[0].mxu0 %v215
    %v295 = vpop.f32.mrb[0].mxu0
    %v296 = vadd.f32 %v222, %v295
    %v297 = vpop.f32.mrb[0].mxu0
    %298 = vdwg.mxu0
    %v299 = vmax.f32 %v291, 0.0
    %v300 = vmax.f32 %v296, 0.0
    %301 = vst [vmem:[%s4] sm:$0xff] %v299
    %302 = vst [vmem:[%s4 + $0x8] sm:$0xff] %v300
    // Predicated region
    $region14: #{simple_nonlinear.2} parent=1 // pred_check
      _
    $region15: #{simple_nonlinear.2} parent=1 // pred_check_branch
      %304 = sbr.rel (0) target = $region17
    $region16: #{simple_nonlinear.2} parent=1 // pred_region
      _
    $region17: #{simple_nonlinear.2} parent=1 // pred_fallthru
      _
    // Predicated region
    $region18: #{simple_nonlinear.2} parent=1 // pred_check
      _
    $region19: #{simple_nonlinear.2} parent=1 // pred_check_branch
      %306 = sbr.rel (0) target = $region21
    $region20: #{simple_nonlinear.2} parent=1 // pred_region
      _
    $region21: #{simple_nonlinear.2} parent=1 // pred_fallthru
      _

</llo_original>
